<compile_context>
chip_gen: v7x
topology: tpu7x:2x2x1
jax: 0.10.0
libtpu: 0.0.40
codegen_flags: <defaults>
</compile_context>

<pallas_src>
import jax
import jax.numpy as jnp
from jax.experimental import pallas as pl
from jax.experimental.pallas import tpu as pltpu

LANE = 128


def _round_up(n, m):
    return ((n + m - 1) // m) * m


# ----------------------------------------------------------------------------- kernel


def _make_kernel(head_sizes, apply_log_softmax, matmul_dtype):
    """Build the fused MLP kernel.

    head_sizes: static per-head output widths (discrete) or (dim_actions,)
                for the continuous branch.
    apply_log_softmax: apply per-head masked log_softmax to the head columns.
    matmul_dtype: optional dtype for MXU operands (e.g. jnp.bfloat16); f32 accum.
    """

    def dot(a, b):
        if matmul_dtype is not None:
            a = a.astype(matmul_dtype)
            b = b.astype(matmul_dtype)
        return jnp.dot(a, b, preferred_element_type=jnp.float32)

    def kernel(x_ref, w1_ref, b1_ref, w2_ref, b2_ref, wo_ref, bo_ref, o_ref):
        x = x_ref[...]

        # trunk: two tanh layers with residual on the second
        x1 = jnp.tanh(dot(x, w1_ref[...]) + b1_ref[...])
        h = jnp.tanh(dot(x1, w2_ref[...]) + b2_ref[...] + x1)

        # fused, lane-dense output projection:
        #   out[:, 0]            = value
        #   out[:, 1:1+total]    = head logits / action_mean
        #   out[:, 1+total:PAD]  = zero padding (zero weight/bias columns)
        out = dot(h, wo_ref[...]) + bo_ref[...]

        if apply_log_softmax:
            # Segmented log_softmax over the padded slab with lane masks:
            # no slices, no concatenate -- full-width selects + reductions only.
            lane = jax.lax.broadcasted_iota(jnp.int32, out.shape, 1)
            res = out
            neg_inf = jnp.float32(-jnp.inf)
            off = 1
            for n in head_sizes:
                mask = (lane >= off) & (lane < off + n)
                m = jnp.max(jnp.where(mask, out, neg_inf), axis=-1, keepdims=True)
                z = out - m
                e = jnp.exp(jnp.where(mask, z, neg_inf))        # 0 outside segment
                lse = jnp.log(jnp.sum(e, axis=-1, keepdims=True))
                res = jnp.where(mask, z - lse, res)
                off += n
            out = res

        # single unmasked lane-dense store -> one writeback DMA per grid step
        o_ref[...] = out.astype(o_ref.dtype)

    return kernel


# ----------------------------------------------------------------------------- wrapper


def _pick_block_b(B, block_b=None):
    """Batch tile size: 1 grid step on single-TC chips, 2 parallel steps on v7x."""
    if block_b is not None:
        tb = max(1, min(block_b, B))
        if tb != B and tb % 8 != 0:
            tb = _round_up(tb, 8)
        return tb
    if B % 8 != 0:
        return B  # full-dim block is exempt from the (8,128) divisibility rule
    try:
        kind = str(jax.devices()[0].device_kind).lower()
    except Exception:  # pragma: no cover - device query failure
        kind = ""
    cores = 2 if "v7" in kind else 1      # v7x: 2 TensorCores per chip
    tb = -(-B // cores)
    tb = min(_round_up(tb, 8), 1024)      # cap for very large batches
    return min(tb, B)


def fuse_output_params(params, *, continuous):
    """Precompute the fused, lane-padded output slab ONCE (not per forward)."""
    if continuous:
        head_sizes = (params["w_mean"].shape[1],)
        ws = [params["w_v"], params["w_mean"]]
        bs = [params["b_v"], params["b_mean"]]
    else:
        head_sizes = tuple(w.shape[1] for w in params["w_heads"])
        ws = [params["w_v"], *params["w_heads"]]
        bs = [params["b_v"], *params["b_heads"]]
    width = 1 + sum(head_sizes)
    pad = _round_up(width, LANE)
    w_out = jnp.pad(jnp.concatenate(ws, axis=1), ((0, 0), (0, pad - width)))
    b_out = jnp.pad(jnp.concatenate(bs, axis=1), ((0, 0), (0, pad - width)))
    out = dict(params)
    out["w_out"] = w_out
    out["b_out"] = b_out
    out["head_sizes"] = head_sizes
    return out


def mlp_forward(x, params, *, continuous, block_b=None, matmul_dtype=None):
    """Fused MLP forward. x: (B, num_inputs) f32. Returns PyTorch-like structure."""
    B, num_inputs = x.shape
    hid = params["w1"].shape[1]
    head_sizes = params["head_sizes"]
    total = sum(head_sizes)
    w_out, b_out = params["w_out"], params["b_out"]
    pad_width = w_out.shape[1]

    tb = _pick_block_b(B, block_b)
    grid = (pl.cdiv(B, tb),)

    batch_map = lambda i: (i, 0)   # activations: walk the batch dim
    const_map = lambda i: (0, 0)   # params: stay resident in VMEM

    out = pl.pallas_call(
        _make_kernel(head_sizes, not continuous, matmul_dtype),
        grid=grid,
        in_specs=[
            pl.BlockSpec((tb, num_inputs), batch_map),
            pl.BlockSpec((num_inputs, hid), const_map),
            pl.BlockSpec((1, hid), const_map),
            pl.BlockSpec((hid, hid), const_map),
            pl.BlockSpec((1, hid), const_map),
            pl.BlockSpec((hid, pad_width), const_map),
            pl.BlockSpec((1, pad_width), const_map),
        ],
        out_specs=pl.BlockSpec((tb, pad_width), batch_map),
        out_shape=jax.ShapeDtypeStruct((B, pad_width), jnp.float32),
        compiler_params=pltpu.CompilerParams(
            dimension_semantics=("parallel",)),
    )(x, params["w1"], params["b1"], params["w2"], params["b2"], w_out, b_out)

    v = out[:, :1]
    tail = out[:, 1:1 + total]

    if continuous:
        action_mean = tail
        # parameter-only broadcast/exp: no batch compute, done in the wrapper
        action_log_std = jnp.broadcast_to(params["action_log_std"],
                                          action_mean.shape)
        action_std = jnp.exp(action_log_std)
        return (action_mean, action_log_std, action_std), v

    logps, off = [], 0
    for n in head_sizes:
        logps.append(tail[:, off:off + n])
        off += n
    return logps, v


# ----------------------------------------------------------------------------- params & reference


def init_params(key, num_inputs, hid_size, *, continuous,
                naction_heads=(), dim_actions=None):
    """Deterministic params, nn.Linear default init, weights stored as (in, out)."""

    def lin(k, fan_in, fan_out):
        kw, kb = jax.random.split(k)
        bound = 1.0 / float(fan_in) ** 0.5
        w = jax.random.uniform(kw, (fan_in, fan_out), jnp.float32, -bound, bound)
        b = jax.random.uniform(kb, (1, fan_out), jnp.float32, -bound, bound)
        return w, b

    keys = jax.random.split(key, 4 + max(len(naction_heads), 1))
    p = {}
    p["w1"], p["b1"] = lin(keys[0], num_inputs, hid_size)
    p["w2"], p["b2"] = lin(keys[1], hid_size, hid_size)
    p["w_v"], p["b_v"] = lin(keys[2], hid_size, 1)
    if continuous:
        p["w_mean"], p["b_mean"] = lin(keys[3], hid_size, dim_actions)
        p["action_log_std"] = jnp.zeros((1, dim_actions), jnp.float32)
    else:
        w_heads, b_heads = [], []
        for i, n in enumerate(naction_heads):
            w, b = lin(keys[4 + i], hid_size, n)
            w_heads.append(w)
            b_heads.append(b)
        p["w_heads"] = tuple(w_heads)
        p["b_heads"] = tuple(b_heads)
    # hoist the fused / padded output slab out of the forward path
    return fuse_output_params(p, continuous=continuous)


def reference_forward(x, p, *, continuous):
    """Pure-JAX reference mirroring the PyTorch module."""
    x1 = jnp.tanh(x @ p["w1"] + p["b1"])
    h = jnp.tanh(x1 @ p["w2"] + p["b2"] + x1)
    v = h @ p["w_v"] + p["b_v"]
    if continuous:
        mean = h @ p["w_mean"] + p["b_mean"]
        log_std = jnp.broadcast_to(p["action_log_std"], mean.shape)
        return (mean, log_std, jnp.exp(log_std)), v
    logps = [jax.nn.log_softmax(h @ w + b, axis=-1)
             for w, b in zip(p["w_heads"], p["b_heads"])]
    return logps, v


# ----------------------------------------------------------------------------- test


if __name__ == "__main__":
    key = jax.random.PRNGKey(0)
    kx, kp_d, kp_c = jax.random.split(key, 3)

    batch = 128            # fills sublanes / MXU rows; 1 step on v5e/v6e, 2 on v7x
    num_inputs = 32
    hid_size = 128
    naction_heads = (5, 7)
    dim_actions = 6
    atol = 1e-4

    x = jax.random.normal(kx, (batch, num_inputs), jnp.float32)

    # ---- discrete-action branch (masked segmented log_softmax heads) ----
    pd = init_params(kp_d, num_inputs, hid_size,
                     continuous=False, naction_heads=naction_heads)
    logps, v = mlp_forward(x, pd, continuous=False)
    jax.block_until_ready((logps, v))
    ref_logps, ref_v = reference_forward(x, pd, continuous=False)
    assert v.shape == (batch, 1)
    assert jnp.allclose(v, ref_v, atol=atol)
    for got, ref, n in zip(logps, ref_logps, naction_heads):
        assert got.shape == (batch, n)
        assert jnp.allclose(got, ref, atol=atol)

    # ---- continuous-action branch ----
    pc = init_params(kp_c, num_inputs, hid_size,
                     continuous=True, dim_actions=dim_actions)
    (a_mean, a_logstd, a_std), vc = mlp_forward(x, pc, continuous=True)
    jax.block_until_ready((a_mean, vc))
    (r_mean, r_logstd, r_std), r_vc = reference_forward(x, pc, continuous=True)
    assert a_mean.shape == (batch, dim_actions)
    assert jnp.allclose(a_mean, r_mean, atol=atol)
    assert jnp.allclose(a_logstd, r_logstd, atol=atol)
    assert jnp.allclose(a_std, r_std, atol=atol)
    assert jnp.allclose(vc, r_vc, atol=atol)

    # NOTE: matmul_dtype=jnp.bfloat16 is available for production paths on
    # v6e/v7x (f32 accumulation); it will not meet atol=1e-4 vs the f32
    # reference, so the checked path above stays f32.

    print("KERNEL_OK")
</pallas_src>

<mosaic_0001>
module attributes {stable_mosaic.version = 11 : i64} {
  func.func @kernel(%arg0: i32, %arg1: memref<128x32xf32, #tpu.memory_space<vmem>>, %arg2: memref<32x128xf32, #tpu.memory_space<vmem>>, %arg3: memref<1x128xf32, #tpu.memory_space<vmem>>, %arg4: memref<128x128xf32, #tpu.memory_space<vmem>>, %arg5: memref<1x128xf32, #tpu.memory_space<vmem>>, %arg6: memref<128x128xf32, #tpu.memory_space<vmem>>, %arg7: memref<1x128xf32, #tpu.memory_space<vmem>>, %arg8: memref<128x128xf32, #tpu.memory_space<vmem>>) attributes {dimension_semantics = [#tpu.dimension_semantics<parallel>], iteration_bounds = array<i64: 1>, scalar_prefetch = 0 : i64, scratch_operands = 0 : i64, tpu.core_type = #tpu.core_type<tc>, window_params = [{transform_indices = @transform_0, window_bounds = array<i64: 128, 32>}, {pipeline_mode = #tpu.pipeline_mode<synchronous>, transform_indices = @transform_1, window_bounds = array<i64: 32, 128>}, {pipeline_mode = #tpu.pipeline_mode<synchronous>, transform_indices = @transform_2, window_bounds = array<i64: 1, 128>}, {pipeline_mode = #tpu.pipeline_mode<synchronous>, transform_indices = @transform_3, window_bounds = array<i64: 128, 128>}, {pipeline_mode = #tpu.pipeline_mode<synchronous>, transform_indices = @transform_4, window_bounds = array<i64: 1, 128>}, {pipeline_mode = #tpu.pipeline_mode<synchronous>, transform_indices = @transform_5, window_bounds = array<i64: 128, 128>}, {pipeline_mode = #tpu.pipeline_mode<synchronous>, transform_indices = @transform_6, window_bounds = array<i64: 1, 128>}, {transform_indices = @transform_7, window_bounds = array<i64: 128, 128>}]} {
    %c0 = arith.constant 0 : index
    %c0_0 = arith.constant 0 : index
    %0 = vector.load %arg1[%c0, %c0_0] : memref<128x32xf32, #tpu.memory_space<vmem>>, vector<128x32xf32>
    %c0_1 = arith.constant 0 : index
    %c0_2 = arith.constant 0 : index
    %1 = vector.load %arg2[%c0_1, %c0_2] : memref<32x128xf32, #tpu.memory_space<vmem>>, vector<32x128xf32>
    %cst = arith.constant dense<0.000000e+00> : vector<128x128xf32>
    %2 = tpu.matmul %0, %1, %cst {dimension_numbers = #tpu.dot_dimension_numbers<[1], [0], [0], [1], [0, 0, 1, 1], [], []>} : vector<128x32xf32>, vector<32x128xf32>, vector<128x128xf32> -> vector<128x128xf32>
    %c0_3 = arith.constant 0 : index
    %c0_4 = arith.constant 0 : index
    %3 = vector.load %arg3[%c0_3, %c0_4] : memref<1x128xf32, #tpu.memory_space<vmem>>, vector<1x128xf32>
    %4 = vector.broadcast %3 : vector<1x128xf32> to vector<128x128xf32>
    %5 = arith.addf %2, %4 : vector<128x128xf32>
    %6 = math.tanh %5 : vector<128x128xf32>
    %c0_5 = arith.constant 0 : index
    %c0_6 = arith.constant 0 : index
    %7 = vector.load %arg4[%c0_5, %c0_6] : memref<128x128xf32, #tpu.memory_space<vmem>>, vector<128x128xf32>
    %cst_7 = arith.constant dense<0.000000e+00> : vector<128x128xf32>
    %8 = tpu.matmul %6, %7, %cst_7 {dimension_numbers = #tpu.dot_dimension_numbers<[1], [0], [0], [1], [0, 0, 1, 1], [], []>} : vector<128x128xf32>, vector<128x128xf32>, vector<128x128xf32> -> vector<128x128xf32>
    %c0_8 = arith.constant 0 : index
    %c0_9 = arith.constant 0 : index
    %9 = vector.load %arg5[%c0_8, %c0_9] : memref<1x128xf32, #tpu.memory_space<vmem>>, vector<1x128xf32>
    %10 = vector.broadcast %9 : vector<1x128xf32> to vector<128x128xf32>
    %11 = arith.addf %8, %10 : vector<128x128xf32>
    %12 = arith.addf %11, %6 : vector<128x128xf32>
    %13 = math.tanh %12 : vector<128x128xf32>
    %c0_10 = arith.constant 0 : index
    %c0_11 = arith.constant 0 : index
    %14 = vector.load %arg6[%c0_10, %c0_11] : memref<128x128xf32, #tpu.memory_space<vmem>>, vector<128x128xf32>
    %cst_12 = arith.constant dense<0.000000e+00> : vector<128x128xf32>
    %15 = tpu.matmul %13, %14, %cst_12 {dimension_numbers = #tpu.dot_dimension_numbers<[1], [0], [0], [1], [0, 0, 1, 1], [], []>} : vector<128x128xf32>, vector<128x128xf32>, vector<128x128xf32> -> vector<128x128xf32>
    %c0_13 = arith.constant 0 : index
    %c0_14 = arith.constant 0 : index
    %16 = vector.load %arg7[%c0_13, %c0_14] : memref<1x128xf32, #tpu.memory_space<vmem>>, vector<1x128xf32>
    %17 = vector.broadcast %16 : vector<1x128xf32> to vector<128x128xf32>
    %18 = arith.addf %15, %17 : vector<128x128xf32>
    %19 = tpu.iota {dimensions = array<i32: 1>} : vector<128x128xi32>
    %c1_i32 = arith.constant 1 : i32
    %20 = vector.broadcast %c1_i32 : i32 to vector<128x128xi32>
    %21 = arith.cmpi sge, %19, %20 : vector<128x128xi32>
    %c6_i32 = arith.constant 6 : i32
    %22 = vector.broadcast %c6_i32 : i32 to vector<128x128xi32>
    %23 = arith.cmpi slt, %19, %22 : vector<128x128xi32>
    %24 = arith.andi %21, %23 : vector<128x128xi1>
    %cst_15 = arith.constant 0xFF800000 : f32
    %25 = vector.broadcast %cst_15 : f32 to vector<128x128xf32>
    %26 = arith.select %24, %18, %25 : vector<128x128xi1>, vector<128x128xf32>
    %cst_16 = arith.constant dense<0xFF800000> : vector<128xf32>
    %27 = vector.multi_reduction <maximumf>, %26, %cst_16 [1] : vector<128x128xf32> to vector<128xf32>
    %28 = vector.shape_cast %27 : vector<128xf32> to vector<128x1xf32>
    %29 = vector.broadcast %28 : vector<128x1xf32> to vector<128x128xf32>
    %30 = arith.subf %18, %29 : vector<128x128xf32>
    %cst_17 = arith.constant 0xFF800000 : f32
    %31 = vector.broadcast %cst_17 : f32 to vector<128x128xf32>
    %32 = arith.select %24, %30, %31 : vector<128x128xi1>, vector<128x128xf32>
    %33 = math.exp %32 : vector<128x128xf32>
    %cst_18 = arith.constant dense<0.000000e+00> : vector<128xf32>
    %34 = vector.multi_reduction <add>, %33, %cst_18 [1] : vector<128x128xf32> to vector<128xf32>
    %35 = vector.shape_cast %34 : vector<128xf32> to vector<128x1xf32>
    %36 = math.log %35 : vector<128x1xf32>
    %37 = vector.broadcast %36 : vector<128x1xf32> to vector<128x128xf32>
    %38 = arith.subf %30, %37 : vector<128x128xf32>
    %39 = arith.select %24, %38, %18 : vector<128x128xi1>, vector<128x128xf32>
    %c6_i32_19 = arith.constant 6 : i32
    %40 = vector.broadcast %c6_i32_19 : i32 to vector<128x128xi32>
    %41 = arith.cmpi sge, %19, %40 : vector<128x128xi32>
    %c13_i32 = arith.constant 13 : i32
    %42 = vector.broadcast %c13_i32 : i32 to vector<128x128xi32>
    %43 = arith.cmpi slt, %19, %42 : vector<128x128xi32>
    %44 = arith.andi %41, %43 : vector<128x128xi1>
    %cst_20 = arith.constant 0xFF800000 : f32
    %45 = vector.broadcast %cst_20 : f32 to vector<128x128xf32>
    %46 = arith.select %44, %18, %45 : vector<128x128xi1>, vector<128x128xf32>
    %cst_21 = arith.constant dense<0xFF800000> : vector<128xf32>
    %47 = vector.multi_reduction <maximumf>, %46, %cst_21 [1] : vector<128x128xf32> to vector<128xf32>
    %48 = vector.shape_cast %47 : vector<128xf32> to vector<128x1xf32>
    %49 = vector.broadcast %48 : vector<128x1xf32> to vector<128x128xf32>
    %50 = arith.subf %18, %49 : vector<128x128xf32>
    %cst_22 = arith.constant 0xFF800000 : f32
    %51 = vector.broadcast %cst_22 : f32 to vector<128x128xf32>
    %52 = arith.select %44, %50, %51 : vector<128x128xi1>, vector<128x128xf32>
    %53 = math.exp %52 : vector<128x128xf32>
    %cst_23 = arith.constant dense<0.000000e+00> : vector<128xf32>
    %54 = vector.multi_reduction <add>, %53, %cst_23 [1] : vector<128x128xf32> to vector<128xf32>
    %55 = vector.shape_cast %54 : vector<128xf32> to vector<128x1xf32>
    %56 = math.log %55 : vector<128x1xf32>
    %57 = vector.broadcast %56 : vector<128x1xf32> to vector<128x128xf32>
    %58 = arith.subf %50, %57 : vector<128x128xf32>
    %59 = arith.select %44, %58, %39 : vector<128x128xi1>, vector<128x128xf32>
    %c0_24 = arith.constant 0 : index
    %c0_25 = arith.constant 0 : index
    %60 = vector.load %arg8[%c0_24, %c0_25] : memref<128x128xf32, #tpu.memory_space<vmem>>, vector<128x128xf32>
    tpu.vector_store %arg8[%c0_24, %c0_25], %59 {strides = array<i32>} : memref<128x128xf32, #tpu.memory_space<vmem>>, vector<128x128xf32>,
    return
  }
  func.func @transform_0(%arg0: i32) -> (i32, i32) {
    %c0_i32 = arith.constant 0 : i32
    %c0_i32_0 = arith.constant 0 : i32
    return %arg0, %c0_i32 : i32, i32
  }
  func.func @transform_1(%arg0: i32) -> (i32, i32) {
    %c0_i32 = arith.constant 0 : i32
    %c0_i32_0 = arith.constant 0 : i32
    %c0_i32_1 = arith.constant 0 : i32
    return %c0_i32, %c0_i32_0 : i32, i32
  }
  func.func @transform_2(%arg0: i32) -> (i32, i32) {
    %c0_i32 = arith.constant 0 : i32
    %c0_i32_0 = arith.constant 0 : i32
    %c0_i32_1 = arith.constant 0 : i32
    return %c0_i32, %c0_i32_0 : i32, i32
  }
  func.func @transform_3(%arg0: i32) -> (i32, i32) {
    %c0_i32 = arith.constant 0 : i32
    %c0_i32_0 = arith.constant 0 : i32
    %c0_i32_1 = arith.constant 0 : i32
    return %c0_i32, %c0_i32_0 : i32, i32
  }
  func.func @transform_4(%arg0: i32) -> (i32, i32) {
    %c0_i32 = arith.constant 0 : i32
    %c0_i32_0 = arith.constant 0 : i32
    %c0_i32_1 = arith.constant 0 : i32
    return %c0_i32, %c0_i32_0 : i32, i32
  }
  func.func @transform_5(%arg0: i32) -> (i32, i32) {
    %c0_i32 = arith.constant 0 : i32
    %c0_i32_0 = arith.constant 0 : i32
    %c0_i32_1 = arith.constant 0 : i32
    return %c0_i32, %c0_i32_0 : i32, i32
  }
  func.func @transform_6(%arg0: i32) -> (i32, i32) {
    %c0_i32 = arith.constant 0 : i32
    %c0_i32_0 = arith.constant 0 : i32
    %c0_i32_1 = arith.constant 0 : i32
    return %c0_i32, %c0_i32_0 : i32, i32
  }
  func.func @transform_7(%arg0: i32) -> (i32, i32) {
    %c0_i32 = arith.constant 0 : i32
    %c0_i32_0 = arith.constant 0 : i32
    return %arg0, %c0_i32 : i32, i32
  }
}

</mosaic_0001>

<llo_original>
// kernel: tpu_custom_call.1
$region0: #{tpu_custom_call.1}
  #allocation0 [shape = 'u32[]', space=smem, size = 0x4, offset = 0x4, fixed_abs, tag = 'smem constant byte address 0x4 - core index']
  #allocation1 [shape = 'u32[144,128]{1,0:T(1,128)}', space=vmem, size = 0x12000, scoped, tag = 'internal scratch']
  %s0 = inlined_call_operand.vmem [shape: f32[128,32], index: 0, kind: input, shape index: {}]
  %s1 = inlined_call_operand.vmem [shape: f32[32,128], index: 1, kind: input, shape index: {}]
  %s2 = inlined_call_operand.vmem [shape: f32[1,128], index: 2, kind: input, shape index: {}]
  %s3 = inlined_call_operand.vmem [shape: f32[128,128], index: 3, kind: input, shape index: {}]
  %s4 = inlined_call_operand.vmem [shape: f32[1,128], index: 4, kind: input, shape index: {}]
  %s5 = inlined_call_operand.hbm [shape: f32[128,128], index: 5, kind: input, shape index: {}]
  %s6 = inlined_call_operand.vmem [shape: f32[1,128], index: 6, kind: input, shape index: {}]
  %s7 = inlined_call_operand.hbm [shape: f32[128,128], index: 7, kind: output, shape index: {}]
  %s8 = sld [smem:[#allocation0]]
  $region42: #{tpu_custom_call.1} parent=0
    _
  %s10 = ssub.s32 1, %s8
  %s11 = scalar_select 0, %s10, %s8
  $region1: #{tpu_custom_call.1} parent=0
    #allocation2 [shape = 'u8[65536]{0}', space=vmem, size = 0x10000, scoped, tag = 'input window, operand 5, single buffered']
    #allocation3 [shape = 's32[1]{0}', space=sflag, size = 0x4, scoped, tag = 'scoped memory for tpu_custom_call.1']
    #allocation4 [shape = 's32[1]{0}', space=sflag, size = 0x4, scoped, tag = 'scoped memory for tpu_custom_call.1']
    #allocation5 [shape = 'u8[65536]{0}', space=vmem, size = 0x10000, scoped, tag = 'output window, operand 0, single buffered']
    %12 = vsyncpa [#allocation3], 0
    %13 = vsyncpa [#allocation4], 0
    // Predicated region
    $region2: #{tpu_custom_call.1} parent=1 // pred_check
      _
    $region3: #{tpu_custom_call.1} parent=1 // pred_check_branch
      %15 = sbr.rel (0) target = $region5
    $region4: #{tpu_custom_call.1} parent=1 // pred_region
      _
    $region5: #{tpu_custom_call.1} parent=1 // pred_fallthru
      _
    // Predicated region
    $region6: #{tpu_custom_call.1} parent=1 // pred_check
      _
    $region7: #{tpu_custom_call.1} parent=1 // pred_check_branch
      %17 = sbr.rel (0) target = $region9
    $region8: #{tpu_custom_call.1} parent=1 // pred_region
      _
    $region9: #{tpu_custom_call.1} parent=1 // pred_fallthru
      _
    // Predicated region
    $region10: #{tpu_custom_call.1} parent=1 // pred_check
      _
    $region11: #{tpu_custom_call.1} parent=1 // pred_check_branch
      %19 = sbr.rel (0) target = $region13
    $region12: #{tpu_custom_call.1} parent=1 // pred_region
      _
    $region13: #{tpu_custom_call.1} parent=1 // pred_fallthru
      _
    // Predicated region
    $region14: #{tpu_custom_call.1} parent=1 // pred_check
      _
    $region15: #{tpu_custom_call.1} parent=1 // pred_check_branch
      %21 = sbr.rel (0) target = $region17
    $region16: #{tpu_custom_call.1} parent=1 // pred_region
      _
    $region17: #{tpu_custom_call.1} parent=1 // pred_fallthru
      _
    // Predicated region
    $region18: #{tpu_custom_call.1} parent=1 // pred_check
      _
    $region19: #{tpu_custom_call.1} parent=1 // pred_check_branch
      %23 = sbr.rel (0) target = $region21
    $region20: #{tpu_custom_call.1} parent=1 // pred_region
      _
    $region21: #{tpu_custom_call.1} parent=1 // pred_fallthru
      _
    // Predicated region
    $region22: #{tpu_custom_call.1} parent=1 // pred_check
      _
    $region23: #{tpu_custom_call.1} parent=1 // pred_check_branch
      %25 = sbr.rel (0) target = $region25
    $region24: #{tpu_custom_call.1} parent=1 // pred_region
      %s27 = ssub.s32 2048, 2048
      %28 = vsyncadd [#allocation3], %s27
      %s29 = sshll.u32 [#allocation2], 4
      %s30 = int_to_ptr.vmem [resolvable:$true] %s29
      %35 = dma.hbm_to_vmem [thread:$0]  %s5, 2048, %s30, [#allocation3], 128, 128, 8
    $region25: #{tpu_custom_call.1} parent=1 // pred_fallthru
      _
    // Predicated region
    $region26: #{tpu_custom_call.1} parent=1 // pred_check
      _
    $region27: #{tpu_custom_call.1} parent=1 // pred_check_branch
      %37 = sbr.rel (0) target = $region29
    $region28: #{tpu_custom_call.1} parent=1 // pred_region
      _
    $region29: #{tpu_custom_call.1} parent=1 // pred_fallthru
      _
    // Predicated region
    $region30: #{tpu_custom_call.1} parent=1 // pred_check
      _
    $region31: #{tpu_custom_call.1} parent=1 // pred_check_branch
      %39 = sbr.rel (0) target = $region33
    $region32: #{tpu_custom_call.1} parent=1 // pred_region
      %40 = dma.done [#allocation3], 2048
    $region33: #{tpu_custom_call.1} parent=1 // pred_fallthru
      _
    %v41 = vld [vmem:[%s0] sm:$0xff]
    %v42 = vld [vmem:[%s0 + $0x8] sm:$0xff]
    %v43 = vld [vmem:[%s0 + $0x10] sm:$0xff]
    %v44 = vld [vmem:[%s0 + $0x18] sm:$0xff]
    %v45 = vld [vmem:[%s0 + $0x20] sm:$0xff]
    %v46 = vld [vmem:[%s0 + $0x28] sm:$0xff]
    %v47 = vld [vmem:[%s0 + $0x30] sm:$0xff]
    %v48 = vld [vmem:[%s0 + $0x38] sm:$0xff]
    %v49 = vld [vmem:[%s0 + $0x40] sm:$0xff]
    %v50 = vld [vmem:[%s0 + $0x48] sm:$0xff]
    %v51 = vld [vmem:[%s0 + $0x50] sm:$0xff]
    %v52 = vld [vmem:[%s0 + $0x58] sm:$0xff]
    %v53 = vld [vmem:[%s0 + $0x60] sm:$0xff]
    %v54 = vld [vmem:[%s0 + $0x68] sm:$0xff]
    %v55 = vld [vmem:[%s0 + $0x70] sm:$0xff]
    %v56 = vld [vmem:[%s0 + $0x78] sm:$0xff]
    %v57 = vld [vmem:[%s1] sm:$0xff]
    %v58 = vld [vmem:[%s1 + $0x8] sm:$0xff]
    %v59 = vld [vmem:[%s1 + $0x10] sm:$0xff]
    %v60 = vld [vmem:[%s1 + $0x18] sm:$0xff]
    %v61 = vld [vmem:[%s2] sm:$0x1]
    %v63 = vlaneseq
    %v64 = vshrl.u32 %v63, 7
    %v65 = vsub.s32 0, %v64
    %v66 = vrot.slane %v61, %v65
    %vm68 = vcmask 261120
    %v70 = vsel %vm68, %v41, 0
    %v73 = vsel %vm68, %v42, 0
    %v76 = vsel %vm68, %v43, 0
    %v79 = vsel %vm68, %v44, 0
    %v82 = vsel %vm68, %v45, 0
    %v85 = vsel %vm68, %v46, 0
    %v88 = vsel %vm68, %v47, 0
    %v91 = vsel %vm68, %v48, 0
    %v94 = vsel %vm68, %v49, 0
    %v97 = vsel %vm68, %v50, 0
    %v100 = vsel %vm68, %v51, 0
    %v103 = vsel %vm68, %v52, 0
    %v106 = vsel %vm68, %v53, 0
    %v109 = vsel %vm68, %v54, 0
    %v112 = vsel %vm68, %v55, 0
    %v115 = vsel %vm68, %v56, 0
    %117 = vmatprep.subr.mxu0 0.0
    %118 = vmatpush1.msra.mxu0 %v57
    %119 = vmatprep.subr.mxu0 0.0
    %120 = vmatpush1.msra.mxu0 %v58
    %121 = vmatprep.subr.mxu0 0.0
    %122 = vmatpush1.msra.mxu0 %v59
    %123 = vmatprep.subr.mxu0 0.0
    %124 = vmatpush1.msra.mxu0 %v60
    %125 = vmatprep.subr.mxu0 0.0
    %126 = vmatpush1.msra.mxu0 0.0
    %127 = vmatprep.subr.mxu0 0.0
    %128 = vmatpush1.msra.mxu0 0.0
    %129 = vmatprep.subr.mxu0 0.0
    %130 = vmatpush1.msra.mxu0 0.0
    %131 = vmatprep.subr.mxu0 0.0
    %132 = vmatpush1.msra.mxu0 0.0
    %133 = vmatprep.subr.mxu0 0.0
    %134 = vmatpush1.msra.mxu0 0.0
    %135 = vmatprep.subr.mxu0 0.0
    %136 = vmatpush1.msra.mxu0 0.0
    %137 = vmatprep.subr.mxu0 0.0
    %138 = vmatpush1.msra.mxu0 0.0
    %139 = vmatprep.subr.mxu0 0.0
    %140 = vmatpush1.msra.mxu0 0.0
    %141 = vmatprep.subr.mxu0 0.0
    %142 = vmatpush1.msra.mxu0 0.0
    %143 = vmatprep.subr.mxu0 0.0
    %144 = vmatpush1.msra.mxu0 0.0
    %145 = vmatprep.subr.mxu0 0.0
    %146 = vmatpush1.msra.mxu0 0.0
    %147 = vmatprep.subr.mxu0 0.0
    %148 = vmatpush1.msra.mxu0 0.0
    %149 = vmatprep.subr.mxu0 0.0
    %150 = vmatpush1.msra.mxu0 0.0
    %151 = vmatprep.subr.mxu0 0.0
    %152 = vmatpush1.msra.mxu0 0.0
    %153 = vmatprep.subr.mxu0 0.0
    %154 = vmatpush1.msra.mxu0 0.0
    %155 = vmatprep.subr.mxu0 0.0
    %156 = vmatpush1.msra.mxu0 0.0
    %157 = vmatprep.subr.mxu0 0.0
    %158 = vmatpush1.msra.mxu0 0.0
    %159 = vmatprep.subr.mxu0 0.0
    %160 = vmatpush1.msra.mxu0 0.0
    %161 = vmatprep.subr.mxu0 0.0
    %162 = vmatpush1.msra.mxu0 0.0
    %163 = vmatprep.subr.mxu0 0.0
    %164 = vmatpush1.msra.mxu0 0.0
    %165 = vmatprep.subr.mxu0 0.0
    %166 = vmatpush1.msra.mxu0 0.0
    %167 = vmatprep.subr.mxu0 0.0
    %168 = vmatpush1.msra.mxu0 0.0
    %169 = vmatprep.subr.mxu0 0.0
    %170 = vmatpush1.msra.mxu0 0.0
    %171 = vmatprep.subr.mxu0 0.0
    %172 = vmatpush1.msra.mxu0 0.0
    %173 = vmatprep.subr.mxu0 0.0
    %174 = vmatpush1.msra.mxu0 0.0
    %175 = vmatprep.subr.mxu0 0.0
    %176 = vmatpush1.msra.mxu0 0.0
    %177 = vmatprep.subr.mxu0 0.0
    %178 = vmatpush1.msra.mxu0 0.0
    %179 = vmatprep.subr.mxu0 0.0
    %180 = vmatpush1.msra.mxu0 0.0
    %181 = vmatprep.mubr.f32.mxu0 0.0
    %182 = vmatmul.mubr.f32.gmra.mrb[0].mxu0 %v70
    %v183 = vpop.f32.mrb[0].mxu0
    %v184 = vadd.f32 %v66, %v183
    %v185 = vpop.f32.mrb[0].mxu0
    %186 = vmatprep.mubr.f32.mxu0 0.0
    %187 = vmatmul.mubr.f32.gmra.mrb[0].mxu0 %v73
    %v188 = vpop.f32.mrb[0].mxu0
    %v189 = vadd.f32 %v66, %v188
    %v190 = vpop.f32.mrb[0].mxu0
    %191 = vmatprep.mubr.f32.mxu0 0.0
    %192 = vmatmul.mubr.f32.gmra.mrb[0].mxu0 %v76
    %v193 = vpop.f32.mrb[0].mxu0
    %v194 = vadd.f32 %v66, %v193
    %v195 = vpop.f32.mrb[0].mxu0
    %196 = vmatprep.mubr.f32.mxu0 0.0
    %197 = vmatmul.mubr.f32.gmra.mrb[0].mxu0 %v79
    %v198 = vpop.f32.mrb[0].mxu0
    %v199 = vadd.f32 %v66, %v198
    %v200 = vpop.f32.mrb[0].mxu0
    %201 = vmatprep.mubr.f32.mxu0 0.0
    %202 = vmatmul.mubr.f32.gmra.mrb[0].mxu0 %v82
    %v203 = vpop.f32.mrb[0].mxu0
    %v204 = vadd.f32 %v66, %v203
    %v205 = vpop.f32.mrb[0].mxu0
    %206 = vmatprep.mubr.f32.mxu0 0.0
    %207 = vmatmul.mubr.f32.gmra.mrb[0].mxu0 %v85
    %v208 = vpop.f32.mrb[0].mxu0
    %v209 = vadd.f32 %v66, %v208
    %v210 = vpop.f32.mrb[0].mxu0
    %211 = vmatprep.mubr.f32.mxu0 0.0
    %212 = vmatmul.mubr.f32.gmra.mrb[0].mxu0 %v88
    %v213 = vpop.f32.mrb[0].mxu0
    %v214 = vadd.f32 %v66, %v213
    %v215 = vpop.f32.mrb[0].mxu0
    %216 = vmatprep.mubr.f32.mxu0 0.0
    %217 = vmatmul.mubr.f32.gmra.mrb[0].mxu0 %v91
    %v218 = vpop.f32.mrb[0].mxu0
    %v219 = vadd.f32 %v66, %v218
    %v220 = vpop.f32.mrb[0].mxu0
    %221 = vmatprep.mubr.f32.mxu0 0.0
    %222 = vmatmul.mubr.f32.gmra.mrb[0].mxu0 %v94
    %v223 = vpop.f32.mrb[0].mxu0
    %v224 = vadd.f32 %v66, %v223
    %v225 = vpop.f32.mrb[0].mxu0
    %226 = vmatprep.mubr.f32.mxu0 0.0
    %227 = vmatmul.mubr.f32.gmra.mrb[0].mxu0 %v97
    %v228 = vpop.f32.mrb[0].mxu0
    %v229 = vadd.f32 %v66, %v228
    %v230 = vpop.f32.mrb[0].mxu0
    %231 = vmatprep.mubr.f32.mxu0 0.0
    %232 = vmatmul.mubr.f32.gmra.mrb[0].mxu0 %v100
    %v233 = vpop.f32.mrb[0].mxu0
    %v234 = vadd.f32 %v66, %v233
    %v235 = vpop.f32.mrb[0].mxu0
    %236 = vmatprep.mubr.f32.mxu0 0.0
    %237 = vmatmul.mubr.f32.gmra.mrb[0].mxu0 %v103
    %v238 = vpop.f32.mrb[0].mxu0
    %v239 = vadd.f32 %v66, %v238
    %v240 = vpop.f32.mrb[0].mxu0
    %241 = vmatprep.mubr.f32.mxu0 0.0
    %242 = vmatmul.mubr.f32.gmra.mrb[0].mxu0 %v106
    %v243 = vpop.f32.mrb[0].mxu0
    %v244 = vadd.f32 %v66, %v243
    %v245 = vpop.f32.mrb[0].mxu0
    %246 = vmatprep.mubr.f32.mxu0 0.0
    %247 = vmatmul.mubr.f32.gmra.mrb[0].mxu0 %v109
    %v248 = vpop.f32.mrb[0].mxu0
    %v249 = vadd.f32 %v66, %v248
    %v250 = vpop.f32.mrb[0].mxu0
    %251 = vmatprep.mubr.f32.mxu0 0.0
    %252 = vmatmul.mubr.f32.gmra.mrb[0].mxu0 %v112
    %v253 = vpop.f32.mrb[0].mxu0
    %v254 = vadd.f32 %v66, %v253
    %v255 = vpop.f32.mrb[0].mxu0
    %256 = vmatprep.mubr.f32.mxu0 0.0
    %257 = vmatmul.mubr.f32.gmra.mrb[0].mxu0 %v115
    %v258 = vpop.f32.mrb[0].mxu0
    %v259 = vadd.f32 %v66, %v258
    %v260 = vpop.f32.mrb[0].mxu0
    %261 = vdwg.mxu0
    %v262 = vtanh.pop %v184
    %v263 = vtanh.pop %v189
    %v264 = vtanh.pop %v194
    %v265 = vtanh.pop %v199
    %v266 = vtanh.pop %v204
    %v267 = vtanh.pop %v209
    %v268 = vtanh.pop %v214
    %v269 = vtanh.pop %v219
    %v270 = vtanh.pop %v224
    %v271 = vtanh.pop %v229
    %v272 = vtanh.pop %v234
    %v273 = vtanh.pop %v239
    %v274 = vtanh.pop %v244
    %v275 = vtanh.pop %v249
    %v276 = vtanh.pop %v254
    %v277 = vtanh.pop %v259
    %v278 = vld [vmem:[%s3] sm:$0xff]
    %v279 = vld [vmem:[%s3 + $0x8] sm:$0xff]
    %v280 = vld [vmem:[%s3 + $0x10] sm:$0xff]
    %v281 = vld [vmem:[%s3 + $0x18] sm:$0xff]
    %v282 = vld [vmem:[%s3 + $0x20] sm:$0xff]
    %v283 = vld [vmem:[%s3 + $0x28] sm:$0xff]
    %v284 = vld [vmem:[%s3 + $0x30] sm:$0xff]
    %v285 = vld [vmem:[%s3 + $0x38] sm:$0xff]
    %v286 = vld [vmem:[%s3 + $0x40] sm:$0xff]
    %v287 = vld [vmem:[%s3 + $0x48] sm:$0xff]
    %v288 = vld [vmem:[%s3 + $0x50] sm:$0xff]
    %v289 = vld [vmem:[%s3 + $0x58] sm:$0xff]
    %v290 = vld [vmem:[%s3 + $0x60] sm:$0xff]
    %v291 = vld [vmem:[%s3 + $0x68] sm:$0xff]
    %v292 = vld [vmem:[%s3 + $0x70] sm:$0xff]
    %v293 = vld [vmem:[%s3 + $0x78] sm:$0xff]
    %v294 = vld [vmem:[%s4] sm:$0x1]
    %v296 = vlaneseq
    %v297 = vshrl.u32 %v296, 7
    %v298 = vsub.s32 0, %v297
    %v299 = vrot.slane %v294, %v298
    %301 = vmatprep.subr.mxu0 0.0
    %302 = vmatpush1.msra.mxu0 %v278
    %303 = vmatprep.subr.mxu0 0.0
    %304 = vmatpush1.msra.mxu0 %v279
    %305 = vmatprep.subr.mxu0 0.0
    %306 = vmatpush1.msra.mxu0 %v280
    %307 = vmatprep.subr.mxu0 0.0
    %308 = vmatpush1.msra.mxu0 %v281
    %309 = vmatprep.subr.mxu0 0.0
    %310 = vmatpush1.msra.mxu0 %v282
    %311 = vmatprep.subr.mxu0 0.0
    %312 = vmatpush1.msra.mxu0 %v283
    %313 = vmatprep.subr.mxu0 0.0
    %314 = vmatpush1.msra.mxu0 %v284
    %315 = vmatprep.subr.mxu0 0.0
    %316 = vmatpush1.msra.mxu0 %v285
    %317 = vmatprep.subr.mxu0 0.0
    %318 = vmatpush1.msra.mxu0 %v286
    %319 = vmatprep.subr.mxu0 0.0
    %320 = vmatpush1.msra.mxu0 %v287
    %321 = vmatprep.subr.mxu0 0.0
    %322 = vmatpush1.msra.mxu0 %v288
    %323 = vmatprep.subr.mxu0 0.0
    %324 = vmatpush1.msra.mxu0 %v289
    %325 = vmatprep.subr.mxu0 0.0
    %326 = vmatpush1.msra.mxu0 %v290
    %327 = vmatprep.subr.mxu0 0.0
    %328 = vmatpush1.msra.mxu0 %v291
    %329 = vmatprep.subr.mxu0 0.0
    %330 = vmatpush1.msra.mxu0 %v292
    %331 = vmatprep.subr.mxu0 0.0
    %332 = vmatpush1.msra.mxu0 %v293
    %333 = vmatprep.subr.mxu0 0.0
    %334 = vmatpush1.msra.mxu0 0.0
    %335 = vmatprep.subr.mxu0 0.0
    %336 = vmatpush1.msra.mxu0 0.0
    %337 = vmatprep.subr.mxu0 0.0
    %338 = vmatpush1.msra.mxu0 0.0
    %339 = vmatprep.subr.mxu0 0.0
    %340 = vmatpush1.msra.mxu0 0.0
    %341 = vmatprep.subr.mxu0 0.0
    %342 = vmatpush1.msra.mxu0 0.0
    %343 = vmatprep.subr.mxu0 0.0
    %344 = vmatpush1.msra.mxu0 0.0
    %345 = vmatprep.subr.mxu0 0.0
    %346 = vmatpush1.msra.mxu0 0.0
    %347 = vmatprep.subr.mxu0 0.0
    %348 = vmatpush1.msra.mxu0 0.0
    %349 = vmatprep.subr.mxu0 0.0
    %350 = vmatpush1.msra.mxu0 0.0
    %351 = vmatprep.subr.mxu0 0.0
    %352 = vmatpush1.msra.mxu0 0.0
    %353 = vmatprep.subr.mxu0 0.0
    %354 = vmatpush1.msra.mxu0 0.0
    %355 = vmatprep.subr.mxu0 0.0
    %356 = vmatpush1.msra.mxu0 0.0
    %357 = vmatprep.subr.mxu0 0.0
    %358 = vmatpush1.msra.mxu0 0.0
    %359 = vmatprep.subr.mxu0 0.0
    %360 = vmatpush1.msra.mxu0 0.0
    %361 = vmatprep.subr.mxu0 0.0
    %362 = vmatpush1.msra.mxu0 0.0
    %363 = vmatprep.subr.mxu0 0.0
    %364 = vmatpush1.msra.mxu0 0.0
    %365 = vmatprep.mubr.f32.mxu0 0.0
    %366 = vmatmul.mubr.f32.gmra.mrb[0].mxu0 %v262
    %v367 = vpop.f32.mrb[0].mxu0
    %v368 = vadd.f32 %v299, %v367
    %v369 = vpop.f32.mrb[0].mxu0
    %370 = vmatprep.mubr.f32.mxu0 0.0
    %371 = vmatmul.mubr.f32.gmra.mrb[0].mxu0 %v263
    %v372 = vpop.f32.mrb[0].mxu0
    %v373 = vadd.f32 %v299, %v372
    %v374 = vpop.f32.mrb[0].mxu0
    %375 = vmatprep.mubr.f32.mxu0 0.0
    %376 = vmatmul.mubr.f32.gmra.mrb[0].mxu0 %v264
    %v377 = vpop.f32.mrb[0].mxu0
    %v378 = vadd.f32 %v299, %v377
    %v379 = vpop.f32.mrb[0].mxu0
    %380 = vmatprep.mubr.f32.mxu0 0.0
    %381 = vmatmul.mubr.f32.gmra.mrb[0].mxu0 %v265
    %v382 = vpop.f32.mrb[0].mxu0
    %v383 = vadd.f32 %v299, %v382
    %v384 = vpop.f32.mrb[0].mxu0
    %385 = vmatprep.mubr.f32.mxu0 0.0
    %386 = vmatmul.mubr.f32.gmra.mrb[0].mxu0 %v266
    %v387 = vpop.f32.mrb[0].mxu0
    %v388 = vadd.f32 %v299, %v387
    %v389 = vpop.f32.mrb[0].mxu0
    %390 = vmatprep.mubr.f32.mxu0 0.0
    %391 = vmatmul.mubr.f32.gmra.mrb[0].mxu0 %v267
    %v392 = vpop.f32.mrb[0].mxu0
    %v393 = vadd.f32 %v299, %v392
    %v394 = vpop.f32.mrb[0].mxu0
    %395 = vmatprep.mubr.f32.mxu0 0.0
    %396 = vmatmul.mubr.f32.gmra.mrb[0].mxu0 %v268
    %v397 = vpop.f32.mrb[0].mxu0
    %v398 = vadd.f32 %v299, %v397
    %v399 = vpop.f32.mrb[0].mxu0
    %400 = vmatprep.mubr.f32.mxu0 0.0
    %401 = vmatmul.mubr.f32.gmra.mrb[0].mxu0 %v269
    %v402 = vpop.f32.mrb[0].mxu0
    %v403 = vadd.f32 %v299, %v402
    %v404 = vpop.f32.mrb[0].mxu0
    %405 = vmatprep.mubr.f32.mxu0 0.0
    %406 = vmatmul.mubr.f32.gmra.mrb[0].mxu0 %v270
    %v407 = vpop.f32.mrb[0].mxu0
    %v408 = vadd.f32 %v299, %v407
    %v409 = vpop.f32.mrb[0].mxu0
    %410 = vmatprep.mubr.f32.mxu0 0.0
    %411 = vmatmul.mubr.f32.gmra.mrb[0].mxu0 %v271
    %v412 = vpop.f32.mrb[0].mxu0
    %v413 = vadd.f32 %v299, %v412
    %v414 = vpop.f32.mrb[0].mxu0
    %415 = vmatprep.mubr.f32.mxu0 0.0
    %416 = vmatmul.mubr.f32.gmra.mrb[0].mxu0 %v272
    %v417 = vpop.f32.mrb[0].mxu0
    %v418 = vadd.f32 %v299, %v417
    %v419 = vpop.f32.mrb[0].mxu0
    %420 = vmatprep.mubr.f32.mxu0 0.0
    %421 = vmatmul.mubr.f32.gmra.mrb[0].mxu0 %v273
    %v422 = vpop.f32.mrb[0].mxu0
    %v423 = vadd.f32 %v299, %v422
    %v424 = vpop.f32.mrb[0].mxu0
    %425 = vmatprep.mubr.f32.mxu0 0.0
    %426 = vmatmul.mubr.f32.gmra.mrb[0].mxu0 %v274
    %v427 = vpop.f32.mrb[0].mxu0
    %v428 = vadd.f32 %v299, %v427
    %v429 = vpop.f32.mrb[0].mxu0
    %430 = vmatprep.mubr.f32.mxu0 0.0
    %431 = vmatmul.mubr.f32.gmra.mrb[0].mxu0 %v275
    %v432 = vpop.f32.mrb[0].mxu0
    %v433 = vadd.f32 %v299, %v432
    %v434 = vpop.f32.mrb[0].mxu0
    %435 = vmatprep.mubr.f32.mxu0 0.0
    %436 = vmatmul.mubr.f32.gmra.mrb[0].mxu0 %v276
    %v437 = vpop.f32.mrb[0].mxu0
    %v438 = vadd.f32 %v299, %v437
    %v439 = vpop.f32.mrb[0].mxu0
    %440 = vmatprep.mubr.f32.mxu0 0.0
    %441 = vmatmul.mubr.f32.gmra.mrb[0].mxu0 %v277
    %v442 = vpop.f32.mrb[0].mxu0
    %v443 = vadd.f32 %v299, %v442
    %v444 = vpop.f32.mrb[0].mxu0
    %445 = vdwg.mxu0
    %v446 = vadd.f32 %v368, %v262
    %v447 = vadd.f32 %v373, %v263
    %v448 = vadd.f32 %v378, %v264
    %v449 = vadd.f32 %v383, %v265
    %v450 = vadd.f32 %v388, %v266
    %v451 = vadd.f32 %v393, %v267
    %v452 = vadd.f32 %v398, %v268
    %v453 = vadd.f32 %v403, %v269
    %v454 = vadd.f32 %v408, %v270
    %v455 = vadd.f32 %v413, %v271
    %v456 = vadd.f32 %v418, %v272
    %v457 = vadd.f32 %v423, %v273
    %v458 = vadd.f32 %v428, %v274
    %v459 = vadd.f32 %v433, %v275
    %v460 = vadd.f32 %v438, %v276
    %v461 = vadd.f32 %v443, %v277
    %v462 = vtanh.pop %v446
    %v463 = vtanh.pop %v447
    %v464 = vtanh.pop %v448
    %v465 = vtanh.pop %v449
    %v466 = vtanh.pop %v450
    %v467 = vtanh.pop %v451
    %v468 = vtanh.pop %v452
    %v469 = vtanh.pop %v453
    %v470 = vtanh.pop %v454
    %v471 = vtanh.pop %v455
    %v472 = vtanh.pop %v456
    %v473 = vtanh.pop %v457
    %v474 = vtanh.pop %v458
    %v475 = vtanh.pop %v459
    %v476 = vtanh.pop %v460
    %v477 = vtanh.pop %v461
    %v478 = vld [vmem:[#allocation2] sm:$0xff]
    %v479 = vld [vmem:[#allocation2 + $0x8] sm:$0xff]
    %v480 = vld [vmem:[#allocation2 + $0x10] sm:$0xff]
    %v481 = vld [vmem:[#allocation2 + $0x18] sm:$0xff]
    %v482 = vld [vmem:[#allocation2 + $0x20] sm:$0xff]
    %v483 = vld [vmem:[#allocation2 + $0x28] sm:$0xff]
    %v484 = vld [vmem:[#allocation2 + $0x30] sm:$0xff]
    %v485 = vld [vmem:[#allocation2 + $0x38] sm:$0xff]
    %v486 = vld [vmem:[#allocation2 + $0x40] sm:$0xff]
    %v487 = vld [vmem:[#allocation2 + $0x48] sm:$0xff]
    %v488 = vld [vmem:[#allocation2 + $0x50] sm:$0xff]
    %v489 = vld [vmem:[#allocation2 + $0x58] sm:$0xff]
    %v490 = vld [vmem:[#allocation2 + $0x60] sm:$0xff]
    %v491 = vld [vmem:[#allocation2 + $0x68] sm:$0xff]
    %v492 = vld [vmem:[#allocation2 + $0x70] sm:$0xff]
    %v493 = vld [vmem:[#allocation2 + $0x78] sm:$0xff]
    %v494 = vld [vmem:[%s6] sm:$0x1]
    %v496 = vlaneseq
    %v497 = vshrl.u32 %v496, 7
    %v498 = vsub.s32 0, %v497
    %v499 = vrot.slane %v494, %v498
    %501 = vmatprep.subr.mxu0 0.0
    %502 = vmatpush1.msra.mxu0 %v478
    %503 = vmatprep.subr.mxu0 0.0
    %504 = vmatpush1.msra.mxu0 %v479
    %505 = vmatprep.subr.mxu0 0.0
    %506 = vmatpush1.msra.mxu0 %v480
    %507 = vmatprep.subr.mxu0 0.0
    %508 = vmatpush1.msra.mxu0 %v481
    %509 = vmatprep.subr.mxu0 0.0
    %510 = vmatpush1.msra.mxu0 %v482
    %511 = vmatprep.subr.mxu0 0.0
    %512 = vmatpush1.msra.mxu0 %v483
    %513 = vmatprep.subr.mxu0 0.0
    %514 = vmatpush1.msra.mxu0 %v484
    %515 = vmatprep.subr.mxu0 0.0
    %516 = vmatpush1.msra.mxu0 %v485
    %517 = vmatprep.subr.mxu0 0.0
    %518 = vmatpush1.msra.mxu0 %v486
    %519 = vmatprep.subr.mxu0 0.0
    %520 = vmatpush1.msra.mxu0 %v487
    %521 = vmatprep.subr.mxu0 0.0
    %522 = vmatpush1.msra.mxu0 %v488
    %523 = vmatprep.subr.mxu0 0.0
    %524 = vmatpush1.msra.mxu0 %v489
    %525 = vmatprep.subr.mxu0 0.0
    %526 = vmatpush1.msra.mxu0 %v490
    %527 = vmatprep.subr.mxu0 0.0
    %528 = vmatpush1.msra.mxu0 %v491
    %529 = vmatprep.subr.mxu0 0.0
    %530 = vmatpush1.msra.mxu0 %v492
    %531 = vmatprep.subr.mxu0 0.0
    %532 = vmatpush1.msra.mxu0 %v493
    %533 = vmatprep.subr.mxu0 0.0
    %534 = vmatpush1.msra.mxu0 0.0
    %535 = vmatprep.subr.mxu0 0.0
    %536 = vmatpush1.msra.mxu0 0.0
    %537 = vmatprep.subr.mxu0 0.0
    %538 = vmatpush1.msra.mxu0 0.0
    %539 = vmatprep.subr.mxu0 0.0
    %540 = vmatpush1.msra.mxu0 0.0
    %541 = vmatprep.subr.mxu0 0.0
    %542 = vmatpush1.msra.mxu0 0.0
    %543 = vmatprep.subr.mxu0 0.0
    %544 = vmatpush1.msra.mxu0 0.0
    %545 = vmatprep.subr.mxu0 0.0
    %546 = vmatpush1.msra.mxu0 0.0
    %547 = vmatprep.subr.mxu0 0.0
    %548 = vmatpush1.msra.mxu0 0.0
    %549 = vmatprep.subr.mxu0 0.0
    %550 = vmatpush1.msra.mxu0 0.0
    %551 = vmatprep.subr.mxu0 0.0
    %552 = vmatpush1.msra.mxu0 0.0
    %553 = vmatprep.subr.mxu0 0.0
    %554 = vmatpush1.msra.mxu0 0.0
    %555 = vmatprep.subr.mxu0 0.0
    %556 = vmatpush1.msra.mxu0 0.0
    %557 = vmatprep.subr.mxu0 0.0
    %558 = vmatpush1.msra.mxu0 0.0
    %559 = vmatprep.subr.mxu0 0.0
    %560 = vmatpush1.msra.mxu0 0.0
    %561 = vmatprep.subr.mxu0 0.0
    %562 = vmatpush1.msra.mxu0 0.0
    %563 = vmatprep.subr.mxu0 0.0
    %564 = vmatpush1.msra.mxu0 0.0
    %565 = vmatprep.mubr.f32.mxu0 0.0
    %566 = vmatmul.mubr.f32.gmra.mrb[0].mxu0 %v462
    %v567 = vpop.f32.mrb[0].mxu0
    %v568 = vadd.f32 %v499, %v567
    %v569 = vpop.f32.mrb[0].mxu0
    %570 = vmatprep.mubr.f32.mxu0 0.0
    %571 = vmatmul.mubr.f32.gmra.mrb[0].mxu0 %v463
    %v572 = vpop.f32.mrb[0].mxu0
    %v573 = vadd.f32 %v499, %v572
    %v574 = vpop.f32.mrb[0].mxu0
    %575 = vmatprep.mubr.f32.mxu0 0.0
    %576 = vmatmul.mubr.f32.gmra.mrb[0].mxu0 %v464
    %v577 = vpop.f32.mrb[0].mxu0
    %v578 = vadd.f32 %v499, %v577
    %v579 = vpop.f32.mrb[0].mxu0
    %580 = vmatprep.mubr.f32.mxu0 0.0
    %581 = vmatmul.mubr.f32.gmra.mrb[0].mxu0 %v465
    %v582 = vpop.f32.mrb[0].mxu0
    %v583 = vadd.f32 %v499, %v582
    %v584 = vpop.f32.mrb[0].mxu0
    %585 = vmatprep.mubr.f32.mxu0 0.0
    %586 = vmatmul.mubr.f32.gmra.mrb[0].mxu0 %v466
    %v587 = vpop.f32.mrb[0].mxu0
    %v588 = vadd.f32 %v499, %v587
    %v589 = vpop.f32.mrb[0].mxu0
    %590 = vmatprep.mubr.f32.mxu0 0.0
    %591 = vmatmul.mubr.f32.gmra.mrb[0].mxu0 %v467
    %v592 = vpop.f32.mrb[0].mxu0
    %v593 = vadd.f32 %v499, %v592
    %v594 = vpop.f32.mrb[0].mxu0
    %595 = vmatprep.mubr.f32.mxu0 0.0
    %596 = vmatmul.mubr.f32.gmra.mrb[0].mxu0 %v468
    %v597 = vpop.f32.mrb[0].mxu0
    %v598 = vadd.f32 %v499, %v597
    %v599 = vpop.f32.mrb[0].mxu0
    %600 = vmatprep.mubr.f32.mxu0 0.0
    %601 = vmatmul.mubr.f32.gmra.mrb[0].mxu0 %v469
    %v602 = vpop.f32.mrb[0].mxu0
    %v603 = vadd.f32 %v499, %v602
    %v604 = vpop.f32.mrb[0].mxu0
    %605 = vmatprep.mubr.f32.mxu0 0.0
    %606 = vmatmul.mubr.f32.gmra.mrb[0].mxu0 %v470
    %v607 = vpop.f32.mrb[0].mxu0
    %v608 = vadd.f32 %v499, %v607
    %v609 = vpop.f32.mrb[0].mxu0
    %610 = vmatprep.mubr.f32.mxu0 0.0
    %611 = vmatmul.mubr.f32.gmra.mrb[0].mxu0 %v471
    %v612 = vpop.f32.mrb[0].mxu0
    %v613 = vadd.f32 %v499, %v612
    %v614 = vpop.f32.mrb[0].mxu0
    %615 = vmatprep.mubr.f32.mxu0 0.0
    %616 = vmatmul.mubr.f32.gmra.mrb[0].mxu0 %v472
    %v617 = vpop.f32.mrb[0].mxu0
    %v618 = vadd.f32 %v499, %v617
    %v619 = vpop.f32.mrb[0].mxu0
    %620 = vmatprep.mubr.f32.mxu0 0.0
    %621 = vmatmul.mubr.f32.gmra.mrb[0].mxu0 %v473
    %v622 = vpop.f32.mrb[0].mxu0
    %v623 = vadd.f32 %v499, %v622
    %v624 = vpop.f32.mrb[0].mxu0
    %625 = vmatprep.mubr.f32.mxu0 0.0
    %626 = vmatmul.mubr.f32.gmra.mrb[0].mxu0 %v474
    %v627 = vpop.f32.mrb[0].mxu0
    %v628 = vadd.f32 %v499, %v627
    %v629 = vpop.f32.mrb[0].mxu0
    %630 = vmatprep.mubr.f32.mxu0 0.0
    %631 = vmatmul.mubr.f32.gmra.mrb[0].mxu0 %v475
    %v632 = vpop.f32.mrb[0].mxu0
    %v633 = vadd.f32 %v499, %v632
    %v634 = vpop.f32.mrb[0].mxu0
    %635 = vmatprep.mubr.f32.mxu0 0.0
    %636 = vmatmul.mubr.f32.gmra.mrb[0].mxu0 %v476
    %v637 = vpop.f32.mrb[0].mxu0
    %v638 = vadd.f32 %v499, %v637
    %v639 = vpop.f32.mrb[0].mxu0
    %640 = vmatprep.mubr.f32.mxu0 0.0
    %641 = vmatmul.mubr.f32.gmra.mrb[0].mxu0 %v477
    %v642 = vpop.f32.mrb[0].mxu0
    %v643 = vadd.f32 %v499, %v642
    %v644 = vpop.f32.mrb[0].mxu0
    %645 = vdwg.mxu0
    %v646 = vlaneseq
    %v647 = vand.u32 %v646, 127
    %vm648 = vcmp.ge.s32.totalorder %v647, 1
    %vm649 = vcmp.lt.s32.totalorder %v647, 6
    %vm650 = vmand %vm648, %vm649
    %v651 = vsel %vm650, %v568, -inf
    %v652 = vsel %vm650, %v573, -inf
    %v653 = vsel %vm650, %v578, -inf
    %v654 = vsel %vm650, %v583, -inf
    %v655 = vsel %vm650, %v588, -inf
    %v656 = vsel %vm650, %v593, -inf
    %v657 = vsel %vm650, %v598, -inf
    %v658 = vsel %vm650, %v603, -inf
    %v659 = vsel %vm650, %v608, -inf
    %v660 = vsel %vm650, %v613, -inf
    %v661 = vsel %vm650, %v618, -inf
    %v662 = vsel %vm650, %v623, -inf
    %v663 = vsel %vm650, %v628, -inf
    %v664 = vsel %vm650, %v633, -inf
    %v665 = vsel %vm650, %v638, -inf
    %v666 = vsel %vm650, %v643, -inf
    %667 = vmax.xlane.f32.xlu0 %v651
    %v668 = vpop.xlane.xlu0 %667
    %669 = vmax.xlane.f32.xlu0 %v652
    %v670 = vpop.xlane.xlu0 %669
    %671 = vmax.xlane.f32.xlu0 %v653
    %v672 = vpop.xlane.xlu0 %671
    %673 = vmax.xlane.f32.xlu0 %v654
    %v674 = vpop.xlane.xlu0 %673
    %675 = vmax.xlane.f32.xlu0 %v655
    %v676 = vpop.xlane.xlu0 %675
    %677 = vmax.xlane.f32.xlu0 %v656
    %v678 = vpop.xlane.xlu0 %677
    %679 = vmax.xlane.f32.xlu0 %v657
    %v680 = vpop.xlane.xlu0 %679
    %681 = vmax.xlane.f32.xlu0 %v658
    %v682 = vpop.xlane.xlu0 %681
    %683 = vmax.xlane.f32.xlu0 %v659
    %v684 = vpop.xlane.xlu0 %683
    %685 = vmax.xlane.f32.xlu0 %v660
    %v686 = vpop.xlane.xlu0 %685
    %687 = vmax.xlane.f32.xlu0 %v661
    %v688 = vpop.xlane.xlu0 %687
    %689 = vmax.xlane.f32.xlu0 %v662
    %v690 = vpop.xlane.xlu0 %689
    %691 = vmax.xlane.f32.xlu0 %v663
    %v692 = vpop.xlane.xlu0 %691
    %693 = vmax.xlane.f32.xlu0 %v664
    %v694 = vpop.xlane.xlu0 %693
    %695 = vmax.xlane.f32.xlu0 %v665
    %v696 = vpop.xlane.xlu0 %695
    %697 = vmax.xlane.f32.xlu0 %v666
    %v698 = vpop.xlane.xlu0 %697
    %v699 = vsub.f32 %v568, %v668
    %v700 = vsub.f32 %v573, %v670
    %v701 = vsub.f32 %v578, %v672
    %v702 = vsub.f32 %v583, %v674
    %v703 = vsub.f32 %v588, %v676
    %v704 = vsub.f32 %v593, %v678
    %v705 = vsub.f32 %v598, %v680
    %v706 = vsub.f32 %v603, %v682
    %v707 = vsub.f32 %v608, %v684
    %v708 = vsub.f32 %v613, %v686
    %v709 = vsub.f32 %v618, %v688
    %v710 = vsub.f32 %v623, %v690
    %v711 = vsub.f32 %v628, %v692
    %v712 = vsub.f32 %v633, %v694
    %v713 = vsub.f32 %v638, %v696
    %v714 = vsub.f32 %v643, %v698
    %v715 = vsel %vm650, %v699, -inf
    %v716 = vsel %vm650, %v700, -inf
    %v717 = vsel %vm650, %v701, -inf
    %v718 = vsel %vm650, %v702, -inf
    %v719 = vsel %vm650, %v703, -inf
    %v720 = vsel %vm650, %v704, -inf
    %v721 = vsel %vm650, %v705, -inf
    %v722 = vsel %vm650, %v706, -inf
    %v723 = vsel %vm650, %v707, -inf
    %v724 = vsel %vm650, %v708, -inf
    %v725 = vsel %vm650, %v709, -inf
    %v726 = vsel %vm650, %v710, -inf
    %v727 = vsel %vm650, %v711, -inf
    %v728 = vsel %vm650, %v712, -inf
    %v729 = vsel %vm650, %v713, -inf
    %v730 = vsel %vm650, %v714, -inf
    %v731 = vmul.f32 %v715, 1.442695
    %v732 = vpow.pop %v731
    %v733 = vmul.f32 %v716, 1.442695
    %v734 = vpow.pop %v733
    %v735 = vmul.f32 %v717, 1.442695
    %v736 = vpow.pop %v735
    %v737 = vmul.f32 %v718, 1.442695
    %v738 = vpow.pop %v737
    %v739 = vmul.f32 %v719, 1.442695
    %v740 = vpow.pop %v739
    %v741 = vmul.f32 %v720, 1.442695
    %v742 = vpow.pop %v741
    %v743 = vmul.f32 %v721, 1.442695
    %v744 = vpow.pop %v743
    %v745 = vmul.f32 %v722, 1.442695
    %v746 = vpow.pop %v745
    %v747 = vmul.f32 %v723, 1.442695
    %v748 = vpow.pop %v747
    %v749 = vmul.f32 %v724, 1.442695
    %v750 = vpow.pop %v749
    %v751 = vmul.f32 %v725, 1.442695
    %v752 = vpow.pop %v751
    %v753 = vmul.f32 %v726, 1.442695
    %v754 = vpow.pop %v753
    %v755 = vmul.f32 %v727, 1.442695
    %v756 = vpow.pop %v755
    %v757 = vmul.f32 %v728, 1.442695
    %v758 = vpow.pop %v757
    %v759 = vmul.f32 %v729, 1.442695
    %v760 = vpow.pop %v759
    %v761 = vmul.f32 %v730, 1.442695
    %v762 = vpow.pop %v761
    %763 = vadd.xlane.f32.xlu0 %v732
    %v764 = vpop.xlane.xlu0 %763
    %765 = vadd.xlane.f32.xlu0 %v734
    %v766 = vpop.xlane.xlu0 %765
    %767 = vadd.xlane.f32.xlu0 %v736
    %v768 = vpop.xlane.xlu0 %767
    %769 = vadd.xlane.f32.xlu0 %v738
    %v770 = vpop.xlane.xlu0 %769
    %771 = vadd.xlane.f32.xlu0 %v740
    %v772 = vpop.xlane.xlu0 %771
    %773 = vadd.xlane.f32.xlu0 %v742
    %v774 = vpop.xlane.xlu0 %773
    %775 = vadd.xlane.f32.xlu0 %v744
    %v776 = vpop.xlane.xlu0 %775
    %777 = vadd.xlane.f32.xlu0 %v746
    %v778 = vpop.xlane.xlu0 %777
    %779 = vadd.xlane.f32.xlu0 %v748
    %v780 = vpop.xlane.xlu0 %779
    %781 = vadd.xlane.f32.xlu0 %v750
    %v782 = vpop.xlane.xlu0 %781
    %783 = vadd.xlane.f32.xlu0 %v752
    %v784 = vpop.xlane.xlu0 %783
    %785 = vadd.xlane.f32.xlu0 %v754
    %v786 = vpop.xlane.xlu0 %785
    %787 = vadd.xlane.f32.xlu0 %v756
    %v788 = vpop.xlane.xlu0 %787
    %789 = vadd.xlane.f32.xlu0 %v758
    %v790 = vpop.xlane.xlu0 %789
    %791 = vadd.xlane.f32.xlu0 %v760
    %v792 = vpop.xlane.xlu0 %791
    %793 = vadd.xlane.f32.xlu0 %v762
    %v794 = vpop.xlane.xlu0 %793
    %v795 = vlog2.pop %v764
    %v796 = vmul.f32 %v795, 0.6931472
    %v797 = vlog2.pop %v766
    %v798 = vmul.f32 %v797, 0.6931472
    %v799 = vlog2.pop %v768
    %v800 = vmul.f32 %v799, 0.6931472
    %v801 = vlog2.pop %v770
    %v802 = vmul.f32 %v801, 0.6931472
    %v803 = vlog2.pop %v772
    %v804 = vmul.f32 %v803, 0.6931472
    %v805 = vlog2.pop %v774
    %v806 = vmul.f32 %v805, 0.6931472
    %v807 = vlog2.pop %v776
    %v808 = vmul.f32 %v807, 0.6931472
    %v809 = vlog2.pop %v778
    %v810 = vmul.f32 %v809, 0.6931472
    %v811 = vlog2.pop %v780
    %v812 = vmul.f32 %v811, 0.6931472
    %v813 = vlog2.pop %v782
    %v814 = vmul.f32 %v813, 0.6931472
    %v815 = vlog2.pop %v784
    %v816 = vmul.f32 %v815, 0.6931472
    %v817 = vlog2.pop %v786
    %v818 = vmul.f32 %v817, 0.6931472
    %v819 = vlog2.pop %v788
    %v820 = vmul.f32 %v819, 0.6931472
    %v821 = vlog2.pop %v790
    %v822 = vmul.f32 %v821, 0.6931472
    %v823 = vlog2.pop %v792
    %v824 = vmul.f32 %v823, 0.6931472
    %v825 = vlog2.pop %v794
    %v826 = vmul.f32 %v825, 0.6931472
    %v827 = vsub.f32 %v699, %v796
    %v828 = vsub.f32 %v700, %v798
    %v829 = vsub.f32 %v701, %v800
    %v830 = vsub.f32 %v702, %v802
    %v831 = vsub.f32 %v703, %v804
    %v832 = vsub.f32 %v704, %v806
    %v833 = vsub.f32 %v705, %v808
    %v834 = vsub.f32 %v706, %v810
    %v835 = vsub.f32 %v707, %v812
    %v836 = vsub.f32 %v708, %v814
    %v837 = vsub.f32 %v709, %v816
    %v838 = vsub.f32 %v710, %v818
    %v839 = vsub.f32 %v711, %v820
    %v840 = vsub.f32 %v712, %v822
    %v841 = vsub.f32 %v713, %v824
    %v842 = vsub.f32 %v714, %v826
    %v843 = vsel %vm650, %v827, %v568
    %v844 = vsel %vm650, %v828, %v573
    %v845 = vsel %vm650, %v829, %v578
    %v846 = vsel %vm650, %v830, %v583
    %v847 = vsel %vm650, %v831, %v588
    %v848 = vsel %vm650, %v832, %v593
    %v849 = vsel %vm650, %v833, %v598
    %v850 = vsel %vm650, %v834, %v603
    %v851 = vsel %vm650, %v835, %v608
    %v852 = vsel %vm650, %v836, %v613
    %v853 = vsel %vm650, %v837, %v618
    %v854 = vsel %vm650, %v838, %v623
    %v855 = vsel %vm650, %v839, %v628
    %v856 = vsel %vm650, %v840, %v633
    %v857 = vsel %vm650, %v841, %v638
    %v858 = vsel %vm650, %v842, %v643
    %vm859 = vcmp.ge.s32.totalorder %v647, 6
    %vm860 = vcmp.lt.s32.totalorder %v647, 13
    %vm861 = vmand %vm859, %vm860
    %v862 = vsel %vm861, %v568, -inf
    %v863 = vsel %vm861, %v573, -inf
    %v864 = vsel %vm861, %v578, -inf
    %v865 = vsel %vm861, %v583, -inf
    %v866 = vsel %vm861, %v588, -inf
    %v867 = vsel %vm861, %v593, -inf
    %v868 = vsel %vm861, %v598, -inf
    %v869 = vsel %vm861, %v603, -inf
    %v870 = vsel %vm861, %v608, -inf
    %v871 = vsel %vm861, %v613, -inf
    %v872 = vsel %vm861, %v618, -inf
    %v873 = vsel %vm861, %v623, -inf
    %v874 = vsel %vm861, %v628, -inf
    %v875 = vsel %vm861, %v633, -inf
    %v876 = vsel %vm861, %v638, -inf
    %v877 = vsel %vm861, %v643, -inf
    %878 = vmax.xlane.f32.xlu0 %v862
    %v879 = vpop.xlane.xlu0 %878
    %880 = vmax.xlane.f32.xlu0 %v863
    %v881 = vpop.xlane.xlu0 %880
    %882 = vmax.xlane.f32.xlu0 %v864
    %v883 = vpop.xlane.xlu0 %882
    %884 = vmax.xlane.f32.xlu0 %v865
    %v885 = vpop.xlane.xlu0 %884
    %886 = vmax.xlane.f32.xlu0 %v866
    %v887 = vpop.xlane.xlu0 %886
    %888 = vmax.xlane.f32.xlu0 %v867
    %v889 = vpop.xlane.xlu0 %888
    %890 = vmax.xlane.f32.xlu0 %v868
    %v891 = vpop.xlane.xlu0 %890
    %892 = vmax.xlane.f32.xlu0 %v869
    %v893 = vpop.xlane.xlu0 %892
    %894 = vmax.xlane.f32.xlu0 %v870
    %v895 = vpop.xlane.xlu0 %894
    %896 = vmax.xlane.f32.xlu0 %v871
    %v897 = vpop.xlane.xlu0 %896
    %898 = vmax.xlane.f32.xlu0 %v872
    %v899 = vpop.xlane.xlu0 %898
    %900 = vmax.xlane.f32.xlu0 %v873
    %v901 = vpop.xlane.xlu0 %900
    %902 = vmax.xlane.f32.xlu0 %v874
    %v903 = vpop.xlane.xlu0 %902
    %904 = vmax.xlane.f32.xlu0 %v875
    %v905 = vpop.xlane.xlu0 %904
    %906 = vmax.xlane.f32.xlu0 %v876
    %v907 = vpop.xlane.xlu0 %906
    %908 = vmax.xlane.f32.xlu0 %v877
    %v909 = vpop.xlane.xlu0 %908
    %v910 = vsub.f32 %v568, %v879
    %v911 = vsub.f32 %v573, %v881
    %v912 = vsub.f32 %v578, %v883
    %v913 = vsub.f32 %v583, %v885
    %v914 = vsub.f32 %v588, %v887
    %v915 = vsub.f32 %v593, %v889
    %v916 = vsub.f32 %v598, %v891
    %v917 = vsub.f32 %v603, %v893
    %v918 = vsub.f32 %v608, %v895
    %v919 = vsub.f32 %v613, %v897
    %v920 = vsub.f32 %v618, %v899
    %v921 = vsub.f32 %v623, %v901
    %v922 = vsub.f32 %v628, %v903
    %v923 = vsub.f32 %v633, %v905
    %v924 = vsub.f32 %v638, %v907
    %v925 = vsub.f32 %v643, %v909
    %v926 = vsel %vm861, %v910, -inf
    %v927 = vsel %vm861, %v911, -inf
    %v928 = vsel %vm861, %v912, -inf
    %v929 = vsel %vm861, %v913, -inf
    %v930 = vsel %vm861, %v914, -inf
    %v931 = vsel %vm861, %v915, -inf
    %v932 = vsel %vm861, %v916, -inf
    %v933 = vsel %vm861, %v917, -inf
    %v934 = vsel %vm861, %v918, -inf
    %v935 = vsel %vm861, %v919, -inf
    %v936 = vsel %vm861, %v920, -inf
    %v937 = vsel %vm861, %v921, -inf
    %v938 = vsel %vm861, %v922, -inf
    %v939 = vsel %vm861, %v923, -inf
    %v940 = vsel %vm861, %v924, -inf
    %v941 = vsel %vm861, %v925, -inf
    %v942 = vmul.f32 %v926, 1.442695
    %v943 = vpow.pop %v942
    %v944 = vmul.f32 %v927, 1.442695
    %v945 = vpow.pop %v944
    %v946 = vmul.f32 %v928, 1.442695
    %v947 = vpow.pop %v946
    %v948 = vmul.f32 %v929, 1.442695
    %v949 = vpow.pop %v948
    %v950 = vmul.f32 %v930, 1.442695
    %v951 = vpow.pop %v950
    %v952 = vmul.f32 %v931, 1.442695
    %v953 = vpow.pop %v952
    %v954 = vmul.f32 %v932, 1.442695
    %v955 = vpow.pop %v954
    %v956 = vmul.f32 %v933, 1.442695
    %v957 = vpow.pop %v956
    %v958 = vmul.f32 %v934, 1.442695
    %v959 = vpow.pop %v958
    %v960 = vmul.f32 %v935, 1.442695
    %v961 = vpow.pop %v960
    %v962 = vmul.f32 %v936, 1.442695
    %v963 = vpow.pop %v962
    %v964 = vmul.f32 %v937, 1.442695
    %v965 = vpow.pop %v964
    %v966 = vmul.f32 %v938, 1.442695
    %v967 = vpow.pop %v966
    %v968 = vmul.f32 %v939, 1.442695
    %v969 = vpow.pop %v968
    %v970 = vmul.f32 %v940, 1.442695
    %v971 = vpow.pop %v970
    %v972 = vmul.f32 %v941, 1.442695
    %v973 = vpow.pop %v972
    %974 = vadd.xlane.f32.xlu0 %v943
    %v975 = vpop.xlane.xlu0 %974
    %976 = vadd.xlane.f32.xlu0 %v945
    %v977 = vpop.xlane.xlu0 %976
    %978 = vadd.xlane.f32.xlu0 %v947
    %v979 = vpop.xlane.xlu0 %978
    %980 = vadd.xlane.f32.xlu0 %v949
    %v981 = vpop.xlane.xlu0 %980
    %982 = vadd.xlane.f32.xlu0 %v951
    %v983 = vpop.xlane.xlu0 %982
    %984 = vadd.xlane.f32.xlu0 %v953
    %v985 = vpop.xlane.xlu0 %984
    %986 = vadd.xlane.f32.xlu0 %v955
    %v987 = vpop.xlane.xlu0 %986
    %988 = vadd.xlane.f32.xlu0 %v957
    %v989 = vpop.xlane.xlu0 %988
    %990 = vadd.xlane.f32.xlu0 %v959
    %v991 = vpop.xlane.xlu0 %990
    %992 = vadd.xlane.f32.xlu0 %v961
    %v993 = vpop.xlane.xlu0 %992
    %994 = vadd.xlane.f32.xlu0 %v963
    %v995 = vpop.xlane.xlu0 %994
    %996 = vadd.xlane.f32.xlu0 %v965
    %v997 = vpop.xlane.xlu0 %996
    %998 = vadd.xlane.f32.xlu0 %v967
    %v999 = vpop.xlane.xlu0 %998
    %1000 = vadd.xlane.f32.xlu0 %v969
    %v1001 = vpop.xlane.xlu0 %1000
    %1002 = vadd.xlane.f32.xlu0 %v971
    %v1003 = vpop.xlane.xlu0 %1002
    %1004 = vadd.xlane.f32.xlu0 %v973
    %v1005 = vpop.xlane.xlu0 %1004
    %v1006 = vlog2.pop %v975
    %v1007 = vmul.f32 %v1006, 0.6931472
    %v1008 = vlog2.pop %v977
    %v1009 = vmul.f32 %v1008, 0.6931472
    %v1010 = vlog2.pop %v979
    %v1011 = vmul.f32 %v1010, 0.6931472
    %v1012 = vlog2.pop %v981
    %v1013 = vmul.f32 %v1012, 0.6931472
    %v1014 = vlog2.pop %v983
    %v1015 = vmul.f32 %v1014, 0.6931472
    %v1016 = vlog2.pop %v985
    %v1017 = vmul.f32 %v1016, 0.6931472
    %v1018 = vlog2.pop %v987
    %v1019 = vmul.f32 %v1018, 0.6931472
    %v1020 = vlog2.pop %v989
    %v1021 = vmul.f32 %v1020, 0.6931472
    %v1022 = vlog2.pop %v991
    %v1023 = vmul.f32 %v1022, 0.6931472
    %v1024 = vlog2.pop %v993
    %v1025 = vmul.f32 %v1024, 0.6931472
    %v1026 = vlog2.pop %v995
    %v1027 = vmul.f32 %v1026, 0.6931472
    %v1028 = vlog2.pop %v997
    %v1029 = vmul.f32 %v1028, 0.6931472
    %v1030 = vlog2.pop %v999
    %v1031 = vmul.f32 %v1030, 0.6931472
    %v1032 = vlog2.pop %v1001
    %v1033 = vmul.f32 %v1032, 0.6931472
    %v1034 = vlog2.pop %v1003
    %v1035 = vmul.f32 %v1034, 0.6931472
    %v1036 = vlog2.pop %v1005
    %v1037 = vmul.f32 %v1036, 0.6931472
    %v1038 = vsub.f32 %v910, %v1007
    %v1039 = vsub.f32 %v911, %v1009
    %v1040 = vsub.f32 %v912, %v1011
    %v1041 = vsub.f32 %v913, %v1013
    %v1042 = vsub.f32 %v914, %v1015
    %v1043 = vsub.f32 %v915, %v1017
    %v1044 = vsub.f32 %v916, %v1019
    %v1045 = vsub.f32 %v917, %v1021
    %v1046 = vsub.f32 %v918, %v1023
    %v1047 = vsub.f32 %v919, %v1025
    %v1048 = vsub.f32 %v920, %v1027
    %v1049 = vsub.f32 %v921, %v1029
    %v1050 = vsub.f32 %v922, %v1031
    %v1051 = vsub.f32 %v923, %v1033
    %v1052 = vsub.f32 %v924, %v1035
    %v1053 = vsub.f32 %v925, %v1037
    %v1054 = vsel %vm861, %v1038, %v843
    %v1055 = vsel %vm861, %v1039, %v844
    %v1056 = vsel %vm861, %v1040, %v845
    %v1057 = vsel %vm861, %v1041, %v846
    %v1058 = vsel %vm861, %v1042, %v847
    %v1059 = vsel %vm861, %v1043, %v848
    %v1060 = vsel %vm861, %v1044, %v849
    %v1061 = vsel %vm861, %v1045, %v850
    %v1062 = vsel %vm861, %v1046, %v851
    %v1063 = vsel %vm861, %v1047, %v852
    %v1064 = vsel %vm861, %v1048, %v853
    %v1065 = vsel %vm861, %v1049, %v854
    %v1066 = vsel %vm861, %v1050, %v855
    %v1067 = vsel %vm861, %v1051, %v856
    %v1068 = vsel %vm861, %v1052, %v857
    %v1069 = vsel %vm861, %v1053, %v858
    %1070 = vst [vmem:[#allocation5] sm:$0xff] %v1054
    %1071 = vst [vmem:[#allocation5 + $0x8] sm:$0xff] %v1055
    %1072 = vst [vmem:[#allocation5 + $0x10] sm:$0xff] %v1056
    %1073 = vst [vmem:[#allocation5 + $0x18] sm:$0xff] %v1057
    %1074 = vst [vmem:[#allocation5 + $0x20] sm:$0xff] %v1058
    %1075 = vst [vmem:[#allocation5 + $0x28] sm:$0xff] %v1059
    %1076 = vst [vmem:[#allocation5 + $0x30] sm:$0xff] %v1060
    %1077 = vst [vmem:[#allocation5 + $0x38] sm:$0xff] %v1061
    %1078 = vst [vmem:[#allocation5 + $0x40] sm:$0xff] %v1062
    %1079 = vst [vmem:[#allocation5 + $0x48] sm:$0xff] %v1063
    %1080 = vst [vmem:[#allocation5 + $0x50] sm:$0xff] %v1064
    %1081 = vst [vmem:[#allocation5 + $0x58] sm:$0xff] %v1065
    %1082 = vst [vmem:[#allocation5 + $0x60] sm:$0xff] %v1066
    %1083 = vst [vmem:[#allocation5 + $0x68] sm:$0xff] %v1067
    %1084 = vst [vmem:[#allocation5 + $0x70] sm:$0xff] %v1068
    %1085 = vst [vmem:[#allocation5 + $0x78] sm:$0xff] %v1069
    // Predicated region
    $region34: #{tpu_custom_call.1} parent=1 // pred_check
      _
    $region35: #{tpu_custom_call.1} parent=1 // pred_check_branch
      %1087 = sbr.rel (0) target = $region37
    $region36: #{tpu_custom_call.1} parent=1 // pred_region
      %s1089 = ssub.s32 2048, 2048
      %1090 = vsyncadd [#allocation4], %s1089
      %s1091 = sshll.u32 [#allocation5], 4
      %s1092 = int_to_ptr.vmem [resolvable:$true] %s1091
      %1097 = dma.vmem_to_hbm [thread:$0]  %s1092, 2048, %s7, [#allocation4], 128, 128, 8
    $region37: #{tpu_custom_call.1} parent=1 // pred_fallthru
      _
    // Predicated region
    $region38: #{tpu_custom_call.1} parent=1 // pred_check
      _
    $region39: #{tpu_custom_call.1} parent=1 // pred_check_branch
      %1099 = sbr.rel (0) target = $region41
    $region40: #{tpu_custom_call.1} parent=1 // pred_region
      %1100 = dma.done [#allocation4], 2048
    $region41: #{tpu_custom_call.1} parent=1 // pred_fallthru
      _
    %1101 = vsyncpa [#allocation3], 1
    %1102 = vsyncpa [#allocation4], 1

</llo_original>
